<compile_context>
chip_gen: v7x
topology: tpu7x:2x2x1
jax: 0.10.0
libtpu: 0.0.40
codegen_flags: <defaults>
</compile_context>

<pallas_src>
import jax
import jax.numpy as jnp
from jax.experimental import pallas as pl
from jax.experimental.pallas import tpu as pltpu


def _attention_block_kernel(x_ref, w1_ref, b1_ref, w2_ref, b2_ref, o_ref):
    # x_ref: (C, tHW) tile — channels on sublanes, spatial on lanes.
    # conv1 (1x1): (Ch, C) @ (C, tHW) -> (Ch, tHW), + bias, relu
    h = jnp.dot(w1_ref[...], x_ref[...], preferred_element_type=jnp.float32) + b1_ref[...]
    h = jnp.maximum(h, 0.0)
    # conv2 (1x1): (C, Ch) @ (Ch, tHW) -> (C, tHW), + bias, sigmoid
    a = jnp.dot(w2_ref[...], h, preferred_element_type=jnp.float32) + b2_ref[...]
    # sigmoid(a) == 0.5 * tanh(a / 2) + 0.5  (one EUP op, exact to ~1 ulp)
    a = 0.5 * jnp.tanh(0.5 * a) + 0.5
    # Elementwise gate; re-read x_ref here (short live range), lane-dense store.
    o_ref[...] = (x_ref[...] * a).astype(o_ref.dtype)


def _chip_budgets():
    """Generation-aware (target_tile_bytes, vmem_limit_bytes)."""
    try:
        info = pltpu.get_tpu_info()
        vmem_cap = int(getattr(info, "vmem_capacity_bytes", 0))
    except Exception:  # pragma: no cover - interpret/CPU fallback
        vmem_cap = 0
    if vmem_cap >= (96 << 20):
        # v5e / v6e: 128 MiB VMEM per core.
        return 4 << 20, 64 << 20
    # v7x (64 MiB per TC) or unknown: keep headroom.
    return 4 << 20, 48 << 20


def attention_block(x_nchw, w1, b1, w2, b2):
    """x_nchw: (B, C, H, W) float32.
    w1: (C//8, C), b1: (C//8,), w2: (C, C//8), b2: (C,)
    (PyTorch conv weights with the 1x1 spatial dims squeezed, native (out,in).)
    """
    B, C, H, W = x_nchw.shape
    Ch = w1.shape[0]
    HW = H * W

    target_tile_bytes, vmem_limit = _chip_budgets()

    # NCHW -> (B, C, H*W): pure reshape — no transpose, no extra HBM pass.
    x_flat = x_nchw.reshape(B, C, HW)

    # Pad hidden channels up to a multiple of 8 so (Ch, tHW) intermediates
    # fill whole (8,128) tiles.  Zero-padded rows/cols contribute nothing.
    ch_pad = max(8, pl.cdiv(Ch, 8) * 8)
    if ch_pad != Ch:
        w1 = jnp.pad(w1, ((0, ch_pad - Ch), (0, 0)))
        b1 = jnp.pad(b1, ((0, ch_pad - Ch),))
        w2 = jnp.pad(w2, ((0, 0), (0, ch_pad - Ch)))

    # Spatial (lane) tile: multiple of 128, ~target_tile_bytes per input tile,
    # clamped to the 128-aligned spatial extent (no host-side padding of x).
    bytes_per_col = C * x_flat.dtype.itemsize
    hw_aligned = pl.cdiv(HW, 128) * 128
    thw = max(128, ((target_tile_bytes // bytes_per_col) // 128) * 128)
    thw = min(thw, hw_aligned)

    # Megacore balance (v7x has 2 TCs): prefer >= ~8 total grid steps when the
    # spatial extent allows, rather than one giant tile per batch element.
    min_total_steps = 8
    nt_balanced = max(1, -(-min_total_steps // B))                 # ceil(8 / B)
    thw_balanced = max(128, pl.cdiv(hw_aligned // 128, nt_balanced) * 128)
    thw = min(thw, thw_balanced)

    n_spatial = pl.cdiv(HW, thw)                                   # partial tail OK
    grid = (B, n_spatial)

    b1_2d = b1.reshape(ch_pad, 1)
    b2_2d = b2.reshape(C, 1)

    out_flat = pl.pallas_call(
        _attention_block_kernel,
        out_shape=jax.ShapeDtypeStruct((B, C, HW), x_flat.dtype),
        grid_spec=pltpu.PrefetchScalarGridSpec(
            num_scalar_prefetch=0,
            grid=grid,
            in_specs=[
                pl.BlockSpec((None, C, thw), lambda b, s: (b, 0, s)),   # x tile
                pl.BlockSpec((ch_pad, C), lambda b, s: (0, 0)),         # w1 (resident)
                pl.BlockSpec((ch_pad, 1), lambda b, s: (0, 0)),         # b1 (resident)
                pl.BlockSpec((C, ch_pad), lambda b, s: (0, 0)),         # w2 (resident)
                pl.BlockSpec((C, 1), lambda b, s: (0, 0)),              # b2 (resident)
            ],
            out_specs=pl.BlockSpec((None, C, thw), lambda b, s: (b, 0, s)),
        ),
        compiler_params=pltpu.CompilerParams(
            dimension_semantics=("parallel", "parallel"),
            vmem_limit_bytes=vmem_limit,
        ),
    )(x_flat, w1, b1_2d, w2, b2_2d)

    return out_flat.reshape(B, C, H, W)


def _reference(x, w1, b1, w2, b2):
    """Pure-JAX reference matching the PyTorch forward (NCHW throughout)."""
    h = jnp.einsum("oc,bchw->bohw", w1, x) + b1[None, :, None, None]
    h = jnp.maximum(h, 0.0)
    a = jnp.einsum("co,bohw->bchw", w2, h) + b2[None, :, None, None]
    a = jax.nn.sigmoid(a)
    return x * a


if __name__ == "__main__":
    key = jax.random.PRNGKey(0)
    B, C, H, W = 2, 32, 16, 16          # channels must be >= 8 (C // 8 hidden)
    Ch = C // 8

    k_x, k_w1, k_b1, k_w2, k_b2 = jax.random.split(key, 5)
    x = jax.random.normal(k_x, (B, C, H, W), dtype=jnp.float32)
    # PyTorch conv weights are (out, in, 1, 1); stored pre-squeezed as (out, in).
    w1 = jax.random.normal(k_w1, (Ch, C), dtype=jnp.float32) * 0.1
    b1 = jax.random.normal(k_b1, (Ch,), dtype=jnp.float32) * 0.1
    w2 = jax.random.normal(k_w2, (C, Ch), dtype=jnp.float32) * 0.1
    b2 = jax.random.normal(k_b2, (C,), dtype=jnp.float32) * 0.1

    out = attention_block(x, w1, b1, w2, b2)
    out = jax.block_until_ready(out)

    ref = _reference(x, w1, b1, w2, b2)
    assert out.shape == (B, C, H, W)
    assert jnp.allclose(out, ref, atol=1e-5, rtol=1e-5), "mismatch vs reference"

    print("KERNEL_OK")
</pallas_src>

<mosaic_0001>
module attributes {stable_mosaic.version = 11 : i64} {
  func.func @_attention_block_kernel(%arg0: i32, %arg1: i32, %arg2: memref<1x32x128xf32, #tpu.memory_space<vmem>>, %arg3: memref<8x32xf32, #tpu.memory_space<vmem>>, %arg4: memref<8x1xf32, #tpu.memory_space<vmem>>, %arg5: memref<32x8xf32, #tpu.memory_space<vmem>>, %arg6: memref<32x1xf32, #tpu.memory_space<vmem>>, %arg7: memref<1x32x128xf32, #tpu.memory_space<vmem>>) attributes {dimension_semantics = [#tpu.dimension_semantics<parallel>, #tpu.dimension_semantics<parallel>], iteration_bounds = array<i64: 2, 2>, scalar_prefetch = 0 : i64, scratch_operands = 0 : i64, tpu.core_type = #tpu.core_type<tc>, window_params = [{transform_indices = @transform_0, window_bounds = array<i64: 1, 32, 128>}, {pipeline_mode = #tpu.pipeline_mode<synchronous>, transform_indices = @transform_1, window_bounds = array<i64: 8, 32>}, {pipeline_mode = #tpu.pipeline_mode<synchronous>, transform_indices = @transform_2, window_bounds = array<i64: 8, 1>}, {pipeline_mode = #tpu.pipeline_mode<synchronous>, transform_indices = @transform_3, window_bounds = array<i64: 32, 8>}, {pipeline_mode = #tpu.pipeline_mode<synchronous>, transform_indices = @transform_4, window_bounds = array<i64: 32, 1>}, {transform_indices = @transform_5, window_bounds = array<i64: 1, 32, 128>}]} {
    %c0 = arith.constant 0 : index
    %c0_0 = arith.constant 0 : index
    %0 = vector.load %arg3[%c0, %c0_0] : memref<8x32xf32, #tpu.memory_space<vmem>>, vector<8x32xf32>
    %c0_1 = arith.constant 0 : index
    %c0_2 = arith.constant 0 : index
    %c0_3 = arith.constant 0 : index
    %1 = vector.load %arg2[%c0_1, %c0_2, %c0_3] : memref<1x32x128xf32, #tpu.memory_space<vmem>>, vector<1x32x128xf32>
    %2 = vector.shape_cast %1 : vector<1x32x128xf32> to vector<32x128xf32>
    %cst = arith.constant dense<0.000000e+00> : vector<8x128xf32>
    %3 = tpu.matmul %0, %2, %cst {dimension_numbers = #tpu.dot_dimension_numbers<[1], [0], [0], [1], [0, 0, 1, 1], [], []>} : vector<8x32xf32>, vector<32x128xf32>, vector<8x128xf32> -> vector<8x128xf32>
    %c0_4 = arith.constant 0 : index
    %c0_5 = arith.constant 0 : index
    %4 = vector.load %arg4[%c0_4, %c0_5] : memref<8x1xf32, #tpu.memory_space<vmem>>, vector<8x1xf32>
    %5 = vector.broadcast %4 : vector<8x1xf32> to vector<8x128xf32>
    %6 = arith.addf %3, %5 : vector<8x128xf32>
    %cst_6 = arith.constant 0.000000e+00 : f32
    %7 = vector.broadcast %cst_6 : f32 to vector<8x128xf32>
    %8 = arith.maximumf %6, %7 : vector<8x128xf32>
    %c0_7 = arith.constant 0 : index
    %c0_8 = arith.constant 0 : index
    %9 = vector.load %arg5[%c0_7, %c0_8] : memref<32x8xf32, #tpu.memory_space<vmem>>, vector<32x8xf32>
    %cst_9 = arith.constant dense<0.000000e+00> : vector<32x128xf32>
    %10 = tpu.matmul %9, %8, %cst_9 {dimension_numbers = #tpu.dot_dimension_numbers<[1], [0], [0], [1], [0, 0, 1, 1], [], []>} : vector<32x8xf32>, vector<8x128xf32>, vector<32x128xf32> -> vector<32x128xf32>
    %c0_10 = arith.constant 0 : index
    %c0_11 = arith.constant 0 : index
    %11 = vector.load %arg6[%c0_10, %c0_11] : memref<32x1xf32, #tpu.memory_space<vmem>>, vector<32x1xf32>
    %12 = vector.broadcast %11 : vector<32x1xf32> to vector<32x128xf32>
    %13 = arith.addf %10, %12 : vector<32x128xf32>
    %cst_12 = arith.constant 5.000000e-01 : f32
    %14 = vector.broadcast %cst_12 : f32 to vector<32x128xf32>
    %15 = arith.mulf %14, %13 : vector<32x128xf32>
    %16 = math.tanh %15 : vector<32x128xf32>
    %cst_13 = arith.constant 5.000000e-01 : f32
    %17 = vector.broadcast %cst_13 : f32 to vector<32x128xf32>
    %18 = arith.mulf %17, %16 : vector<32x128xf32>
    %cst_14 = arith.constant 5.000000e-01 : f32
    %19 = vector.broadcast %cst_14 : f32 to vector<32x128xf32>
    %20 = arith.addf %18, %19 : vector<32x128xf32>
    %c0_15 = arith.constant 0 : index
    %c0_16 = arith.constant 0 : index
    %c0_17 = arith.constant 0 : index
    %21 = vector.load %arg2[%c0_15, %c0_16, %c0_17] : memref<1x32x128xf32, #tpu.memory_space<vmem>>, vector<1x32x128xf32>
    %22 = vector.shape_cast %21 : vector<1x32x128xf32> to vector<32x128xf32>
    %23 = arith.mulf %22, %20 : vector<32x128xf32>
    %c0_18 = arith.constant 0 : index
    %c0_19 = arith.constant 0 : index
    %c0_20 = arith.constant 0 : index
    %24 = vector.load %arg7[%c0_18, %c0_19, %c0_20] : memref<1x32x128xf32, #tpu.memory_space<vmem>>, vector<1x32x128xf32>
    %25 = vector.shape_cast %24 : vector<1x32x128xf32> to vector<32x128xf32>
    %26 = vector.shape_cast %23 : vector<32x128xf32> to vector<1x32x128xf32>
    tpu.vector_store %arg7[%c0_18, %c0_19, %c0_20], %26 {strides = array<i32>} : memref<1x32x128xf32, #tpu.memory_space<vmem>>, vector<1x32x128xf32>,
    return
  }
  func.func @transform_0(%arg0: i32, %arg1: i32) -> (i32, i32, i32) {
    %c0_i32 = arith.constant 0 : i32
    %c0_i32_0 = arith.constant 0 : i32
    return %arg0, %c0_i32, %arg1 : i32, i32, i32
  }
  func.func @transform_1(%arg0: i32, %arg1: i32) -> (i32, i32) {
    %c0_i32 = arith.constant 0 : i32
    %c0_i32_0 = arith.constant 0 : i32
    %c0_i32_1 = arith.constant 0 : i32
    return %c0_i32, %c0_i32_0 : i32, i32
  }
  func.func @transform_2(%arg0: i32, %arg1: i32) -> (i32, i32) {
    %c0_i32 = arith.constant 0 : i32
    %c0_i32_0 = arith.constant 0 : i32
    %c0_i32_1 = arith.constant 0 : i32
    return %c0_i32, %c0_i32_0 : i32, i32
  }
  func.func @transform_3(%arg0: i32, %arg1: i32) -> (i32, i32) {
    %c0_i32 = arith.constant 0 : i32
    %c0_i32_0 = arith.constant 0 : i32
    %c0_i32_1 = arith.constant 0 : i32
    return %c0_i32, %c0_i32_0 : i32, i32
  }
  func.func @transform_4(%arg0: i32, %arg1: i32) -> (i32, i32) {
    %c0_i32 = arith.constant 0 : i32
    %c0_i32_0 = arith.constant 0 : i32
    %c0_i32_1 = arith.constant 0 : i32
    return %c0_i32, %c0_i32_0 : i32, i32
  }
  func.func @transform_5(%arg0: i32, %arg1: i32) -> (i32, i32, i32) {
    %c0_i32 = arith.constant 0 : i32
    %c0_i32_0 = arith.constant 0 : i32
    return %arg0, %c0_i32, %arg1 : i32, i32, i32
  }
}

</mosaic_0001>

<llo_original>
// kernel: tpu_custom_call.1
$region0: #{tpu_custom_call.1}
  #allocation0 [shape = 'u32[]', space=smem, size = 0x4, offset = 0x4, fixed_abs, tag = 'smem constant byte address 0x4 - core index']
  #allocation1 [shape = 'u32[144,128]{1,0:T(1,128)}', space=vmem, size = 0x12000, scoped, tag = 'internal scratch']
  %s0 = inlined_call_operand.hbm [shape: f32[2,32,256], index: 0, kind: input, shape index: {}]
  %s1 = inlined_call_operand.vmem [shape: f32[8,32], index: 1, kind: input, shape index: {}]
  %s2 = inlined_call_operand.vmem [shape: f32[8,1], index: 2, kind: input, shape index: {}]
  %s3 = inlined_call_operand.vmem [shape: f32[32,8], index: 3, kind: input, shape index: {}]
  %s4 = inlined_call_operand.vmem [shape: f32[32,1], index: 4, kind: input, shape index: {}]
  %s5 = inlined_call_operand.hbm [shape: f32[2,32,256], index: 5, kind: output, shape index: {}]
  %s6 = sld [smem:[#allocation0]]
  $region57: #{tpu_custom_call.1} parent=0
    _
  %s8 = ssub.s32 1, %s6
  %s9 = scalar_select 0, %s8, %s6
  $region1: #{tpu_custom_call.1} parent=0
    #allocation2 [shape = 'u8[32768]{0}', space=vmem, size = 0x8000, scoped, tag = 'input window, operand 0']
    #allocation3 [shape = 's32[2]{0}', space=sflag, size = 0x8, scoped, tag = 'scoped memory for tpu_custom_call.1']
    #allocation4 [shape = 's32[2]{0}', space=sflag, size = 0x8, scoped, tag = 'scoped memory for tpu_custom_call.1']
    #allocation5 [shape = 'u8[32768]{0}', space=vmem, size = 0x8000, scoped, tag = 'output window, operand 0']
    %10 = vsyncpa [#allocation3], 0
    %s11 = scalar_lea.sflag [#allocation3], 1
    %12 = vsyncpa %s11, 0
    %13 = vsyncpa [#allocation4], 0
    %s14 = scalar_lea.sflag [#allocation4], 1
    %15 = vsyncpa %s14, 0
    loop: start=0, step=1, limit=6
    $region2: #{tpu_custom_call.1} parent=1 // loop_pre_header
      _
    $region3: #{tpu_custom_call.1} parent=1 // loop_header
      %s17 = sphi 0, %s21
      %p18 = scmp.ge.s32.totalorder %s17, 6
      %s24 = sphi 0, %s36
      %s25 = sphi 0, %s32
      %s26 = sphi 0, %s24
      %s27 = sphi 0, %s25
      %s28 = sphi 0, %s26
      %s29 = sphi 0, %s27
      %s41 = sphi 0, %s43
      %s44 = sphi 0, %s41
      %s45 = sphi 0, %s44
      %s61 = sphi 0, %s45
      %s65 = sphi 0, %s65
      %s67 = sphi 0, %s65
      %s68 = sphi 0, %s67
      %s82 = sphi 0, %s68
      %s86 = sphi 0, %s86
      %s88 = sphi 0, %s86
      %s89 = sphi 0, %s88
      %s103 = sphi 0, %s89
      %s107 = sphi 0, %s107
      %s109 = sphi 0, %s107
      %s110 = sphi 0, %s109
      %s124 = sphi 0, %s110
      %s128 = sphi 0, %s128
      %s130 = sphi 0, %s128
      %s131 = sphi 0, %s130
      %s145 = sphi 0, %s131
      %s153 = sphi 0, %s155
      %s156 = sphi 0, %s153
      %s157 = sphi 0, %s156
      %s173 = sphi 0, %s157
    $region4: #{tpu_custom_call.1} parent=1 // loop_header_branch
      %20 = sbr.rel (%p18) target = $region8
    $region5: #{tpu_custom_call.1} parent=1 // loop_body
      %s22 = ssub.s32 %s17, 1
      %s23 = ssub.s32 %s17, 2
      %s30 = sadd.s32 1, %s25
      %p31 = scmp.ge.s32.totalorder %s30, 2
      %s32 = scalar_select %p31, 0, %s30
      %s33 = sadd.s32 1, %s24
      %s34 = scalar_select %p31, %s33, %s24
      %p35 = scmp.ge.s32.totalorder %s34, 2
      %s36 = scalar_select %p35, 0, %s34
      %s37 = ssub.s32 %s24, %s36
      %s38 = ssub.s32 %s25, %s32
      %s39 = sor.u32 %s37, %s38
      %p40 = scmp.eq.s32.totalorder %s39, 0
      %s42 = sadd.s32 %s41, 1
      %s43 = scalar_select %p40, %s41, %s42
      %p46 = pneg %p40
      %p47 = scmp.eq.s32.totalorder %s17, 3
      %p48 = por %p46, %p47
      %p49 = scmp.ne.s32.totalorder %s41, %s44
      %p50 = scmp.eq.s32.totalorder %s17, 0
      %p51 = por %p49, %p50
      %p52 = scmp.ne.s32.totalorder %s41, %s44
      %p53 = scmp.eq.s32.totalorder %s22, 3
      %p54 = por %p52, %p53
      %p55 = scmp.ne.s32.totalorder %s44, %s45
      %p56 = scmp.eq.s32.totalorder %s22, 0
      %p57 = por %p55, %p56
      %p58 = scmp.ne.s32.totalorder %s44, %s45
      %p59 = scmp.eq.s32.totalorder %s23, 3
      %p60 = por %p58, %p59
      %p62 = scmp.ne.s32.totalorder %s45, %s61
      %p63 = scmp.eq.s32.totalorder %s23, 0
      %p64 = por %p62, %p63
      %s66 = sadd.s32 %s65, 1
      %p69 = scmp.eq.s32.totalorder %s17, 3
      %p70 = scmp.ne.s32.totalorder %s65, %s67
      %p71 = scmp.eq.s32.totalorder %s17, 0
      %p72 = por %p70, %p71
      %p73 = scmp.ne.s32.totalorder %s65, %s67
      %p74 = scmp.eq.s32.totalorder %s22, 3
      %p75 = por %p73, %p74
      %p76 = scmp.ne.s32.totalorder %s67, %s68
      %p77 = scmp.eq.s32.totalorder %s22, 0
      %p78 = por %p76, %p77
      %p79 = scmp.ne.s32.totalorder %s67, %s68
      %p80 = scmp.eq.s32.totalorder %s23, 3
      %p81 = por %p79, %p80
      %p83 = scmp.ne.s32.totalorder %s68, %s82
      %p84 = scmp.eq.s32.totalorder %s23, 0
      %p85 = por %p83, %p84
      %s87 = sadd.s32 %s86, 1
      %p90 = scmp.eq.s32.totalorder %s17, 3
      %p91 = scmp.ne.s32.totalorder %s86, %s88
      %p92 = scmp.eq.s32.totalorder %s17, 0
      %p93 = por %p91, %p92
      %p94 = scmp.ne.s32.totalorder %s86, %s88
      %p95 = scmp.eq.s32.totalorder %s22, 3
      %p96 = por %p94, %p95
      %p97 = scmp.ne.s32.totalorder %s88, %s89
      %p98 = scmp.eq.s32.totalorder %s22, 0
      %p99 = por %p97, %p98
      %p100 = scmp.ne.s32.totalorder %s88, %s89
      %p101 = scmp.eq.s32.totalorder %s23, 3
      %p102 = por %p100, %p101
      %p104 = scmp.ne.s32.totalorder %s89, %s103
      %p105 = scmp.eq.s32.totalorder %s23, 0
      %p106 = por %p104, %p105
      %s108 = sadd.s32 %s107, 1
      %p111 = scmp.eq.s32.totalorder %s17, 3
      %p112 = scmp.ne.s32.totalorder %s107, %s109
      %p113 = scmp.eq.s32.totalorder %s17, 0
      %p114 = por %p112, %p113
      %p115 = scmp.ne.s32.totalorder %s107, %s109
      %p116 = scmp.eq.s32.totalorder %s22, 3
      %p117 = por %p115, %p116
      %p118 = scmp.ne.s32.totalorder %s109, %s110
      %p119 = scmp.eq.s32.totalorder %s22, 0
      %p120 = por %p118, %p119
      %p121 = scmp.ne.s32.totalorder %s109, %s110
      %p122 = scmp.eq.s32.totalorder %s23, 3
      %p123 = por %p121, %p122
      %p125 = scmp.ne.s32.totalorder %s110, %s124
      %p126 = scmp.eq.s32.totalorder %s23, 0
      %p127 = por %p125, %p126
      %s129 = sadd.s32 %s128, 1
      %p132 = scmp.eq.s32.totalorder %s17, 3
      %p133 = scmp.ne.s32.totalorder %s128, %s130
      %p134 = scmp.eq.s32.totalorder %s17, 0
      %p135 = por %p133, %p134
      %p136 = scmp.ne.s32.totalorder %s128, %s130
      %p137 = scmp.eq.s32.totalorder %s22, 3
      %p138 = por %p136, %p137
      %p139 = scmp.ne.s32.totalorder %s130, %s131
      %p140 = scmp.eq.s32.totalorder %s22, 0
      %p141 = por %p139, %p140
      %p142 = scmp.ne.s32.totalorder %s130, %s131
      %p143 = scmp.eq.s32.totalorder %s23, 3
      %p144 = por %p142, %p143
      %p146 = scmp.ne.s32.totalorder %s131, %s145
      %p147 = scmp.eq.s32.totalorder %s23, 0
      %p148 = por %p146, %p147
      %s149 = ssub.s32 %s24, %s36
      %s150 = ssub.s32 %s25, %s32
      %s151 = sor.u32 %s149, %s150
      %p152 = scmp.eq.s32.totalorder %s151, 0
      %s154 = sadd.s32 %s153, 1
      %s155 = scalar_select %p152, %s153, %s154
      %p158 = pneg %p152
      %p159 = scmp.eq.s32.totalorder %s17, 3
      %p160 = por %p158, %p159
      %p161 = scmp.ne.s32.totalorder %s153, %s156
      %p162 = scmp.eq.s32.totalorder %s17, 0
      %p163 = por %p161, %p162
      %p164 = scmp.ne.s32.totalorder %s153, %s156
      %p165 = scmp.eq.s32.totalorder %s22, 3
      %p166 = por %p164, %p165
      %p167 = scmp.ne.s32.totalorder %s156, %s157
      %p168 = scmp.eq.s32.totalorder %s22, 0
      %p169 = por %p167, %p168
      %p170 = scmp.ne.s32.totalorder %s156, %s157
      %p171 = scmp.eq.s32.totalorder %s23, 3
      %p172 = por %p170, %p171
      %p174 = scmp.ne.s32.totalorder %s157, %s173
      %p175 = scmp.eq.s32.totalorder %s23, 0
      %p176 = por %p174, %p175
      %p177 = scmp.le.s32.totalorder 1, %s17
      %p178 = scmp.lt.s32.totalorder %s17, 5
      %p179 = pnand %p177, %p178
      %p180 = pneg %p179
      // Predicated region
      $region9: #{tpu_custom_call.1} parent=5 // pred_check
        _
      $region10: #{tpu_custom_call.1} parent=5 // pred_check_branch
        %182 = sbr.rel (%p179) target = $region12
      $region11: #{tpu_custom_call.1} parent=5 // pred_region
        %s183 = ssub.s32 %s17, 1
        // Predicated region
        $region13: #{tpu_custom_call.1} parent=11 // pred_check
          %p184 = pneg %p78
        $region14: #{tpu_custom_call.1} parent=11 // pred_check_branch
          %186 = sbr.rel (%p184) target = $region16
        $region15: #{tpu_custom_call.1} parent=11 // pred_region
          _
        $region16: #{tpu_custom_call.1} parent=11 // pred_fallthru
          _
        // Predicated region
        $region17: #{tpu_custom_call.1} parent=11 // pred_check
          %p187 = pneg %p99
        $region18: #{tpu_custom_call.1} parent=11 // pred_check_branch
          %189 = sbr.rel (%p187) target = $region20
        $region19: #{tpu_custom_call.1} parent=11 // pred_region
          _
        $region20: #{tpu_custom_call.1} parent=11 // pred_fallthru
          _
        // Predicated region
        $region21: #{tpu_custom_call.1} parent=11 // pred_check
          %p190 = pneg %p120
        $region22: #{tpu_custom_call.1} parent=11 // pred_check_branch
          %192 = sbr.rel (%p190) target = $region24
        $region23: #{tpu_custom_call.1} parent=11 // pred_region
          _
        $region24: #{tpu_custom_call.1} parent=11 // pred_fallthru
          _
        // Predicated region
        $region25: #{tpu_custom_call.1} parent=11 // pred_check
          %p193 = pneg %p141
        $region26: #{tpu_custom_call.1} parent=11 // pred_check_branch
          %195 = sbr.rel (%p193) target = $region28
        $region27: #{tpu_custom_call.1} parent=11 // pred_region
          _
        $region28: #{tpu_custom_call.1} parent=11 // pred_fallthru
          _
      $region12: #{tpu_custom_call.1} parent=5 // pred_fallthru
        _
      %p196 = scmp.lt.s32.totalorder %s17, 4
      // Predicated region
      $region29: #{tpu_custom_call.1} parent=5 // pred_check
        %p197 = pneg %p196
      $region30: #{tpu_custom_call.1} parent=5 // pred_check_branch
        %199 = sbr.rel (%p197) target = $region32
      $region31: #{tpu_custom_call.1} parent=5 // pred_region
        // Predicated region
        $region33: #{tpu_custom_call.1} parent=31 // pred_check
          %p200 = pneg %p51
        $region34: #{tpu_custom_call.1} parent=31 // pred_check_branch
          %202 = sbr.rel (%p200) target = $region36
        $region35: #{tpu_custom_call.1} parent=31 // pred_region
          %s203 = sand.u32 %s41, 1
          %s204 = scalar_lea.sflag [#allocation3], %s203
          %s205 = sand.u32 %s41, 1
          %s206 = smul.addr %s205, 32
          %s207 = scalar_lea.vmem [#allocation2], %s206
          %s209 = ssub.s32 512, 512
          %210 = vsyncadd %s204, %s209
          %s211 = smul.addr %s24, 8
          %s212 = sadd.s32 %s25, %s211
          %s213 = smul.addr %s212, 128
          %s214 = scalar_lea.hbm %s0, %s213
          %s215 = sshll.u32 %s207, 4
          %s216 = int_to_ptr.vmem [resolvable:$true] %s215
          %221 = dma.hbm_to_vmem [thread:$0]  %s214, 512, %s216, %s204, 256, 128, 8
        $region36: #{tpu_custom_call.1} parent=31 // pred_fallthru
          _
      $region32: #{tpu_custom_call.1} parent=5 // pred_fallthru
        _
      %p222 = scmp.le.s32.totalorder 1, %s17
      %p223 = scmp.lt.s32.totalorder %s17, 5
      %p224 = pnand %p222, %p223
      %p225 = pneg %p224
      // Predicated region
      $region37: #{tpu_custom_call.1} parent=5 // pred_check
        _
      $region38: #{tpu_custom_call.1} parent=5 // pred_check_branch
        %227 = sbr.rel (%p224) target = $region40
      $region39: #{tpu_custom_call.1} parent=5 // pred_region
        %s228 = ssub.s32 %s17, 1
        %s229 = sand.u32 %s44, 1
        %s230 = scalar_lea.sflag [#allocation3], %s229
        %s231 = sand.u32 %s44, 1
        %s232 = smul.addr %s231, 32
        %s233 = scalar_lea.vmem [#allocation2], %s232
        // Predicated region
        $region41: #{tpu_custom_call.1} parent=39 // pred_check
          %p234 = pneg %p57
        $region42: #{tpu_custom_call.1} parent=39 // pred_check_branch
          %236 = sbr.rel (%p234) target = $region44
        $region43: #{tpu_custom_call.1} parent=39 // pred_region
          %237 = dma.done %s230, 512
        $region44: #{tpu_custom_call.1} parent=39 // pred_fallthru
          _
        %s238 = sand.u32 %s44, 1
        %s239 = scalar_lea.sflag [#allocation3], %s238
        %s240 = sand.u32 %s44, 1
        %s241 = smul.addr %s240, 32
        %s242 = scalar_lea.vmem [#allocation2], %s241
        %p243 = pneg %p57
        %p244 = pneg %p54
        %p245 = pneg %p78
        %p246 = pneg %p75
        %p247 = pneg %p99
        %p248 = pneg %p96
        %p249 = pneg %p120
        %p250 = pneg %p117
        %p251 = pneg %p141
        %p252 = pneg %p138
        %p253 = pneg %p169
        %p254 = pneg %p166
        %s255 = sand.u32 %s156, 1
        %s256 = scalar_lea.sflag [#allocation4], %s255
        %s257 = sand.u32 %s156, 1
        %s258 = smul.addr %s257, 32
        %s259 = scalar_lea.vmem [#allocation5], %s258
        %v260 = vld [vmem:[%s1] sm:$0xff]
        %v261 = vld [vmem:[%s233] sm:$0xff]
        %v262 = vld [vmem:[%s233 + $0x8] sm:$0xff]
        %v263 = vld [vmem:[%s233 + $0x10] sm:$0xff]
        %v264 = vld [vmem:[%s233 + $0x18] sm:$0xff]
        %v265 = vld [vmem:[%s2] sm:$0xff]
        %267 = vset.pattern.permute.xlu0 0
        %268 = vperm.xlu0 %267, %v265
        %v269 = vpop.permute.xlu0 %268
        %vm271 = vcmask 261120
        %v273 = vsel %vm271, %v260, 0
        %275 = vmatprep.subr.mxu0 0.0
        %276 = vmatpush1.msra.mxu0 %v261
        %277 = vmatprep.subr.mxu0 0.0
        %278 = vmatpush1.msra.mxu0 %v262
        %279 = vmatprep.subr.mxu0 0.0
        %280 = vmatpush1.msra.mxu0 %v263
        %281 = vmatprep.subr.mxu0 0.0
        %282 = vmatpush1.msra.mxu0 %v264
        %283 = vmatprep.subr.mxu0 0.0
        %284 = vmatpush1.msra.mxu0 0.0
        %285 = vmatprep.subr.mxu0 0.0
        %286 = vmatpush1.msra.mxu0 0.0
        %287 = vmatprep.subr.mxu0 0.0
        %288 = vmatpush1.msra.mxu0 0.0
        %289 = vmatprep.subr.mxu0 0.0
        %290 = vmatpush1.msra.mxu0 0.0
        %291 = vmatprep.subr.mxu0 0.0
        %292 = vmatpush1.msra.mxu0 0.0
        %293 = vmatprep.subr.mxu0 0.0
        %294 = vmatpush1.msra.mxu0 0.0
        %295 = vmatprep.subr.mxu0 0.0
        %296 = vmatpush1.msra.mxu0 0.0
        %297 = vmatprep.subr.mxu0 0.0
        %298 = vmatpush1.msra.mxu0 0.0
        %299 = vmatprep.subr.mxu0 0.0
        %300 = vmatpush1.msra.mxu0 0.0
        %301 = vmatprep.subr.mxu0 0.0
        %302 = vmatpush1.msra.mxu0 0.0
        %303 = vmatprep.subr.mxu0 0.0
        %304 = vmatpush1.msra.mxu0 0.0
        %305 = vmatprep.subr.mxu0 0.0
        %306 = vmatpush1.msra.mxu0 0.0
        %307 = vmatprep.subr.mxu0 0.0
        %308 = vmatpush1.msra.mxu0 0.0
        %309 = vmatprep.subr.mxu0 0.0
        %310 = vmatpush1.msra.mxu0 0.0
        %311 = vmatprep.subr.mxu0 0.0
        %312 = vmatpush1.msra.mxu0 0.0
        %313 = vmatprep.subr.mxu0 0.0
        %314 = vmatpush1.msra.mxu0 0.0
        %315 = vmatprep.subr.mxu0 0.0
        %316 = vmatpush1.msra.mxu0 0.0
        %317 = vmatprep.subr.mxu0 0.0
        %318 = vmatpush1.msra.mxu0 0.0
        %319 = vmatprep.subr.mxu0 0.0
        %320 = vmatpush1.msra.mxu0 0.0
        %321 = vmatprep.subr.mxu0 0.0
        %322 = vmatpush1.msra.mxu0 0.0
        %323 = vmatprep.subr.mxu0 0.0
        %324 = vmatpush1.msra.mxu0 0.0
        %325 = vmatprep.subr.mxu0 0.0
        %326 = vmatpush1.msra.mxu0 0.0
        %327 = vmatprep.subr.mxu0 0.0
        %328 = vmatpush1.msra.mxu0 0.0
        %329 = vmatprep.subr.mxu0 0.0
        %330 = vmatpush1.msra.mxu0 0.0
        %331 = vmatprep.subr.mxu0 0.0
        %332 = vmatpush1.msra.mxu0 0.0
        %333 = vmatprep.subr.mxu0 0.0
        %334 = vmatpush1.msra.mxu0 0.0
        %335 = vmatprep.subr.mxu0 0.0
        %336 = vmatpush1.msra.mxu0 0.0
        %337 = vmatprep.subr.mxu0 0.0
        %338 = vmatpush1.msra.mxu0 0.0
        %339 = vmatprep.mubr.f32.mxu0 0.0
        %340 = vmatmul.mubr.f32.gmra.mrb[0].mxu0 %v273
        %v341 = vpop.f32.mrb[0].mxu0
        %v342 = vadd.f32 %v269, %v341
        %v343 = vpop.f32.mrb[0].mxu0
        %344 = vdwg.mxu0
        %v345 = vmax.f32 %v342, 0.0
        %v346 = vld [vmem:[%s3] sm:$0xff]
        %v347 = vld [vmem:[%s3 + $0x8] sm:$0xff]
        %v348 = vld [vmem:[%s3 + $0x10] sm:$0xff]
        %v349 = vld [vmem:[%s3 + $0x18] sm:$0xff]
        %v350 = vld [vmem:[%s4] sm:$0xff]
        %v351 = vld [vmem:[%s4 + $0x8] sm:$0xff]
        %v352 = vld [vmem:[%s4 + $0x10] sm:$0xff]
        %v353 = vld [vmem:[%s4 + $0x18] sm:$0xff]
        %355 = vset.pattern.permute.xlu0 0
        %356 = vperm.xlu0 %355, %v350
        %v357 = vpop.permute.xlu0 %356
        %360 = vset.pattern.permute.xlu0 0
        %361 = vperm.xlu0 %360, %v351
        %v362 = vpop.permute.xlu0 %361
        %365 = vset.pattern.permute.xlu0 0
        %366 = vperm.xlu0 %365, %v352
        %v367 = vpop.permute.xlu0 %366
        %370 = vset.pattern.permute.xlu0 0
        %371 = vperm.xlu0 %370, %v353
        %v372 = vpop.permute.xlu0 %371
        %vm374 = vcmask 64512
        %v376 = vsel %vm374, %v346, 0
        %v379 = vsel %vm374, %v347, 0
        %v382 = vsel %vm374, %v348, 0
        %v385 = vsel %vm374, %v349, 0
        %387 = vmatprep.subr.mxu0 0.0
        %388 = vmatpush1.msra.mxu0 %v345
        %389 = vmatprep.subr.mxu0 0.0
        %390 = vmatpush1.msra.mxu0 0.0
        %391 = vmatprep.subr.mxu0 0.0
        %392 = vmatpush1.msra.mxu0 0.0
        %393 = vmatprep.subr.mxu0 0.0
        %394 = vmatpush1.msra.mxu0 0.0
        %395 = vmatprep.subr.mxu0 0.0
        %396 = vmatpush1.msra.mxu0 0.0
        %397 = vmatprep.subr.mxu0 0.0
        %398 = vmatpush1.msra.mxu0 0.0
        %399 = vmatprep.subr.mxu0 0.0
        %400 = vmatpush1.msra.mxu0 0.0
        %401 = vmatprep.subr.mxu0 0.0
        %402 = vmatpush1.msra.mxu0 0.0
        %403 = vmatprep.subr.mxu0 0.0
        %404 = vmatpush1.msra.mxu0 0.0
        %405 = vmatprep.subr.mxu0 0.0
        %406 = vmatpush1.msra.mxu0 0.0
        %407 = vmatprep.subr.mxu0 0.0
        %408 = vmatpush1.msra.mxu0 0.0
        %409 = vmatprep.subr.mxu0 0.0
        %410 = vmatpush1.msra.mxu0 0.0
        %411 = vmatprep.subr.mxu0 0.0
        %412 = vmatpush1.msra.mxu0 0.0
        %413 = vmatprep.subr.mxu0 0.0
        %414 = vmatpush1.msra.mxu0 0.0
        %415 = vmatprep.subr.mxu0 0.0
        %416 = vmatpush1.msra.mxu0 0.0
        %417 = vmatprep.subr.mxu0 0.0
        %418 = vmatpush1.msra.mxu0 0.0
        %419 = vmatprep.subr.mxu0 0.0
        %420 = vmatpush1.msra.mxu0 0.0
        %421 = vmatprep.subr.mxu0 0.0
        %422 = vmatpush1.msra.mxu0 0.0
        %423 = vmatprep.subr.mxu0 0.0
        %424 = vmatpush1.msra.mxu0 0.0
        %425 = vmatprep.subr.mxu0 0.0
        %426 = vmatpush1.msra.mxu0 0.0
        %427 = vmatprep.subr.mxu0 0.0
        %428 = vmatpush1.msra.mxu0 0.0
        %429 = vmatprep.subr.mxu0 0.0
        %430 = vmatpush1.msra.mxu0 0.0
        %431 = vmatprep.subr.mxu0 0.0
        %432 = vmatpush1.msra.mxu0 0.0
        %433 = vmatprep.subr.mxu0 0.0
        %434 = vmatpush1.msra.mxu0 0.0
        %435 = vmatprep.subr.mxu0 0.0
        %436 = vmatpush1.msra.mxu0 0.0
        %437 = vmatprep.subr.mxu0 0.0
        %438 = vmatpush1.msra.mxu0 0.0
        %439 = vmatprep.subr.mxu0 0.0
        %440 = vmatpush1.msra.mxu0 0.0
        %441 = vmatprep.subr.mxu0 0.0
        %442 = vmatpush1.msra.mxu0 0.0
        %443 = vmatprep.subr.mxu0 0.0
        %444 = vmatpush1.msra.mxu0 0.0
        %445 = vmatprep.subr.mxu0 0.0
        %446 = vmatpush1.msra.mxu0 0.0
        %447 = vmatprep.subr.mxu0 0.0
        %448 = vmatpush1.msra.mxu0 0.0
        %449 = vmatprep.subr.mxu0 0.0
        %450 = vmatpush1.msra.mxu0 0.0
        %451 = vmatprep.mubr.f32.mxu0 0.0
        %452 = vmatmul.mubr.f32.gmra.mrb[0].mxu0 %v376
        %v453 = vpop.f32.mrb[0].mxu0
        %v454 = vadd.f32 %v357, %v453
        %v455 = vpop.f32.mrb[0].mxu0
        %456 = vmatprep.mubr.f32.mxu0 0.0
        %457 = vmatmul.mubr.f32.gmra.mrb[0].mxu0 %v379
        %v458 = vpop.f32.mrb[0].mxu0
        %v459 = vadd.f32 %v362, %v458
        %v460 = vpop.f32.mrb[0].mxu0
        %461 = vmatprep.mubr.f32.mxu0 0.0
        %462 = vmatmul.mubr.f32.gmra.mrb[0].mxu0 %v382
        %v463 = vpop.f32.mrb[0].mxu0
        %v464 = vadd.f32 %v367, %v463
        %v465 = vpop.f32.mrb[0].mxu0
        %466 = vmatprep.mubr.f32.mxu0 0.0
        %467 = vmatmul.mubr.f32.gmra.mrb[0].mxu0 %v385
        %v468 = vpop.f32.mrb[0].mxu0
        %v469 = vadd.f32 %v372, %v468
        %v470 = vpop.f32.mrb[0].mxu0
        %471 = vdwg.mxu0
        %v472 = vmul.f32 %v454, 0.5
        %v473 = vmul.f32 %v459, 0.5
        %v474 = vmul.f32 %v464, 0.5
        %v475 = vmul.f32 %v469, 0.5
        %v476 = vtanh.pop %v472
        %v477 = vtanh.pop %v473
        %v478 = vtanh.pop %v474
        %v479 = vtanh.pop %v475
        %v480 = vmul.f32 %v476, 0.5
        %v481 = vmul.f32 %v477, 0.5
        %v482 = vmul.f32 %v478, 0.5
        %v483 = vmul.f32 %v479, 0.5
        %v484 = vadd.f32 %v480, 0.5
        %v485 = vadd.f32 %v481, 0.5
        %v486 = vadd.f32 %v482, 0.5
        %v487 = vadd.f32 %v483, 0.5
        %v488 = vmul.f32 %v261, %v484
        %v489 = vmul.f32 %v262, %v485
        %v490 = vmul.f32 %v263, %v486
        %v491 = vmul.f32 %v264, %v487
        %492 = vst [vmem:[%s259] sm:$0xff] %v488
        %493 = vst [vmem:[%s259 + $0x8] sm:$0xff] %v489
        %494 = vst [vmem:[%s259 + $0x10] sm:$0xff] %v490
        %495 = vst [vmem:[%s259 + $0x18] sm:$0xff] %v491
        %s496 = sand.u32 %s156, 1
        %s497 = scalar_lea.sflag [#allocation4], %s496
        %s498 = sand.u32 %s156, 1
        %s499 = smul.addr %s498, 32
        %s500 = scalar_lea.vmem [#allocation5], %s499
        // Predicated region
        $region45: #{tpu_custom_call.1} parent=39 // pred_check
          %p501 = pneg %p166
        $region46: #{tpu_custom_call.1} parent=39 // pred_check_branch
          %503 = sbr.rel (%p501) target = $region48
        $region47: #{tpu_custom_call.1} parent=39 // pred_region
          %s505 = ssub.s32 512, 512
          %506 = vsyncadd %s497, %s505
          %s507 = smul.addr %s26, 8
          %s508 = sadd.s32 %s27, %s507
          %s509 = smul.addr %s508, 128
          %s510 = scalar_lea.hbm %s5, %s509
          %s511 = sshll.u32 %s500, 4
          %s512 = int_to_ptr.vmem [resolvable:$true] %s511
          %517 = dma.vmem_to_hbm [thread:$0]  %s512, 512, %s510, %s497, 128, 256, 8
        $region48: #{tpu_custom_call.1} parent=39 // pred_fallthru
          _
      $region40: #{tpu_custom_call.1} parent=5 // pred_fallthru
        _
      %p518 = scmp.le.s32.totalorder 2, %s17
      // Predicated region
      $region49: #{tpu_custom_call.1} parent=5 // pred_check
        %p519 = pneg %p518
      $region50: #{tpu_custom_call.1} parent=5 // pred_check_branch
        %521 = sbr.rel (%p519) target = $region52
      $region51: #{tpu_custom_call.1} parent=5 // pred_region
        %s522 = ssub.s32 %s17, 2
        // Predicated region
        $region53: #{tpu_custom_call.1} parent=51 // pred_check
          %p523 = pneg %p172
        $region54: #{tpu_custom_call.1} parent=51 // pred_check_branch
          %525 = sbr.rel (%p523) target = $region56
        $region55: #{tpu_custom_call.1} parent=51 // pred_region
          %s526 = sand.u32 %s157, 1
          %s527 = scalar_lea.sflag [#allocation4], %s526
          %s528 = sand.u32 %s157, 1
          %s529 = smul.addr %s528, 32
          %s530 = scalar_lea.vmem [#allocation5], %s529
          %531 = dma.done %s527, 512
        $region56: #{tpu_custom_call.1} parent=51 // pred_fallthru
          _
      $region52: #{tpu_custom_call.1} parent=5 // pred_fallthru
        _
    $region6: #{tpu_custom_call.1} parent=1 // loop_footer
      %s21 = sadd.s32 1, %s17
    $region7: #{tpu_custom_call.1} parent=1 // loop_footer_branch
      %16 = sbr.rel target = $region3
    $region8: #{tpu_custom_call.1} parent=1 // loop_exit
      _
    %532 = vsyncpa [#allocation3], 1
    %s533 = scalar_lea.sflag [#allocation3], 1
    %534 = vsyncpa %s533, 1
    %535 = vsyncpa [#allocation4], 1
    %s536 = scalar_lea.sflag [#allocation4], 1
    %537 = vsyncpa %s536, 1

</llo_original>
